<compile_context>
chip_gen: v7x
topology: tpu7x:2x2x1
jax: 0.10.0
libtpu: 0.0.40
codegen_flags: <defaults>
</compile_context>

<pallas_src>
import functools

import jax
import jax.numpy as jnp
from jax.experimental import pallas as pl
from jax.experimental.pallas import tpu as pltpu

EPS = 1e-5        # dice epsilon (module-level EPS in the PyTorch code)
CCE_EPS = 1e-7    # CategoricalCrossentropyLoss default epsilon


def _loss_kernel(pred_ref, lab_ref, widx_ref, hidx_ref, dice_ref, ce_ref, *,
                 D, H, W, pool, pad, factor):
    pred = pred_ref[...].astype(jnp.float32)          # (C, D, HW)
    lab = lab_ref[...].astype(jnp.float32)            # (C, D, HW)
    w_idx = widx_ref[...]                             # (1, HW) int32, lane -> w coordinate
    h_idx = hidx_ref[...]                             # (1, HW) int32, lane -> h coordinate
    C = pred.shape[0]
    HW = pred.shape[2]

    # ---------------- Dice term: per-channel spatial reductions ----------------
    def _spatial_sum(x):                               # (C, D, HW) -> (C, 1)
        return jnp.sum(jnp.sum(x, axis=2), axis=1, keepdims=True)

    num = _spatial_sum(pred * lab)
    den1 = _spatial_sum(pred * pred)
    den2 = _spatial_sum(lab * lab)
    dice = 2.0 * num / (den1 + den2 + EPS)             # (C, 1)
    dice_part = jnp.sum(1.0 - dice, keepdims=True)     # (1, 1) = sum_c (1 - dice_c)
    dice_ref[...] = dice_part[None]                    # (1, 1, 1)

    # -------- boundary mask: AvgPool3d(pool, stride=1, zero-pad, count_include_pad) -----
    # Separable box filter.  W / H shifts act on the flattened lane axis (offsets 1 and W)
    # with zero extension + per-lane edge masks; D shifts act on the sublane axis.
    def _pool_lanes(x, step, idx, extent):
        """sum over taps t in [0, pool): shift of x by (t-pad)*step lanes, zero-padded
        along the `extent`-sized coordinate given by idx."""
        L = x.shape[-1]
        m = pad * step
        if m > 0:
            z = jnp.zeros(x.shape[:-1] + (m,), x.dtype)
            xp = jnp.concatenate([z, x, z], axis=-1)   # (C, D, L + 2m)
        else:
            xp = x
        acc = jnp.zeros_like(x)
        for t in range(pool):
            off = t - pad
            contrib = xp[..., m + off * step: m + off * step + L]
            if off != 0:
                valid = jnp.logical_and(idx + off >= 0, idx + off <= extent - 1)
                contrib = jnp.where(valid, contrib, 0.0)
            acc = acc + contrib
        return acc

    s_w = _pool_lanes(lab, 1, w_idx, W)                # sum over W taps
    s_hw = _pool_lanes(s_w, W, h_idx, H)               # sum over H taps

    if pad > 0:                                        # sum over D taps (sublane axis)
        zd = jnp.zeros((C, pad, HW), jnp.float32)
        sp = jnp.concatenate([zd, s_hw, zd], axis=1)   # (C, D + 2*pad, HW)
    else:
        sp = s_hw
    box = jnp.zeros_like(s_hw)
    for t in range(pool):
        box = box + sp[:, t:t + D, :]

    avg = box * (1.0 / float(pool ** 3))               # count_include_pad average
    inb = jnp.logical_and(avg >= CCE_EPS, avg <= 1.0 - CCE_EPS).astype(jnp.float32)
    wb = jnp.max(inb, axis=0) * factor                 # (D, HW) boundary weight

    # ---------------- cross-entropy term (channel sum factored out) ----------------
    yp = jnp.clip(pred, CCE_EPS, 1.0)
    ce_sum_c = jnp.sum(-lab * jnp.log(yp), axis=0)     # (D, HW)
    weighted = ce_sum_c * (1.0 + wb)                   # == sum_c(ce) + sum_c(ce)*wb
    ce_part = jnp.sum(weighted, keepdims=True)         # (1, 1)
    ce_ref[...] = ce_part[None]                        # (1, 1, 1)


def dice_plus_cce_loss(pred, label, *, boundaries_weight_factor, boundaries_pool,
                       sigma=0.02):
    """pred, label: float arrays of shape (N, C, D, H, W)."""
    N, C, D, H, W = pred.shape
    pool = int(boundaries_pool)
    pad = (pool - 1) // 2                              # same as the PyTorch padding formula
    HW = H * W

    # Lane-dense layout: fold (H, W) onto the lane axis.  This reshape is contiguous
    # (layout-preserving in HBM), so it costs nothing.
    pred2 = pred.reshape(N, C, D, HW)
    lab2 = label.reshape(N, C, D, HW)

    # Small per-lane coordinate tables used for the box-filter edge masks.
    lane = jnp.arange(HW, dtype=jnp.int32)
    w_idx = (lane % W).reshape(1, HW)
    h_idx = (lane // W).reshape(1, HW)

    kernel = functools.partial(
        _loss_kernel, D=D, H=H, W=W, pool=pool, pad=pad,
        factor=float(boundaries_weight_factor))

    dice_parts, ce_parts = pl.pallas_call(
        kernel,
        out_shape=(jax.ShapeDtypeStruct((N, 1, 1), jnp.float32),
                   jax.ShapeDtypeStruct((N, 1, 1), jnp.float32)),
        grid_spec=pltpu.PrefetchScalarGridSpec(
            num_scalar_prefetch=0,
            grid=(N,),
            in_specs=[
                pl.BlockSpec((pl.Squeezed(), C, D, HW), lambda n: (n, 0, 0, 0)),
                pl.BlockSpec((pl.Squeezed(), C, D, HW), lambda n: (n, 0, 0, 0)),
                pl.BlockSpec((1, HW), lambda n: (0, 0)),
                pl.BlockSpec((1, HW), lambda n: (0, 0)),
            ],
            out_specs=[
                pl.BlockSpec((1, 1, 1), lambda n: (n, 0, 0)),
                pl.BlockSpec((1, 1, 1), lambda n: (n, 0, 0)),
            ],
        ),
        compiler_params=pltpu.CompilerParams(dimension_semantics=("parallel",)),
    )(pred2, lab2, w_idx, h_idx)

    dice_loss = jnp.sum(dice_parts) / float(N * C)
    ce_loss = jnp.sum(ce_parts) / float(N * D * H * W)
    return dice_loss + float(sigma) * ce_loss


def _reference_loss(pred, label, factor, pool, sigma):
    """Pure-JAX reference of the PyTorch forward (for verification)."""
    num = jnp.sum(pred * label, axis=(2, 3, 4))
    den1 = jnp.sum(pred * pred, axis=(2, 3, 4))
    den2 = jnp.sum(label * label, axis=(2, 3, 4))
    dice = 2.0 * num / (den1 + den2 + EPS)
    dice_loss = jnp.mean(1.0 - dice)

    yp = jnp.clip(pred, CCE_EPS, 1.0)
    ce = -label * jnp.log(yp)
    N, C, D, H, W = label.shape
    p = (pool - 1) // 2
    lp = jnp.pad(label, ((0, 0), (0, 0), (p, p), (p, p), (p, p)))
    acc = jnp.zeros_like(label)
    for dd in range(pool):
        for hh in range(pool):
            for ww in range(pool):
                acc = acc + lp[:, :, dd:dd + D, hh:hh + H, ww:ww + W]
    avg = acc / float(pool ** 3)
    inb = ((avg >= CCE_EPS) & (avg <= 1.0 - CCE_EPS)).astype(jnp.float32)
    wb = jnp.max(inb, axis=1, keepdims=True) * factor
    loss = ce + ce * wb
    ce_loss = jnp.mean(jnp.sum(loss, axis=1))
    return dice_loss + sigma * ce_loss


if __name__ == "__main__":
    key = jax.random.PRNGKey(0)
    N, C, D, H, W = 2, 4, 8, 8, 8
    boundaries_weight_factor = 2.0
    boundaries_pool = 3
    sigma = 0.02

    k1, k2 = jax.random.split(key)
    logits = jax.random.normal(k1, (N, C, D, H, W), jnp.float32)
    pred = jax.nn.softmax(logits, axis=1)                              # soft predictions
    lab_idx = jax.random.randint(k2, (N, D, H, W), 0, C)
    label = jax.nn.one_hot(lab_idx, C, axis=1, dtype=jnp.float32)      # one-hot GT

    out = dice_plus_cce_loss(pred, label,
                             boundaries_weight_factor=boundaries_weight_factor,
                             boundaries_pool=boundaries_pool, sigma=sigma)
    out = jax.block_until_ready(out)

    ref = _reference_loss(pred, label, boundaries_weight_factor, boundaries_pool, sigma)
    ref = jax.block_until_ready(ref)

    assert bool(jnp.isfinite(out)), "Loss not finite"
    assert bool(jnp.allclose(out, ref, rtol=1e-3, atol=1e-5)), (out, ref)
    print("KERNEL_OK")
</pallas_src>

<mosaic_0001>
module attributes {stable_mosaic.version = 11 : i64} {
  func.func @_loss_kernel(%arg0: i32, %arg1: memref<1x4x8x64xf32, #tpu.memory_space<vmem>>, %arg2: memref<1x4x8x64xf32, #tpu.memory_space<vmem>>, %arg3: memref<1x64xi32, #tpu.memory_space<vmem>>, %arg4: memref<1x64xi32, #tpu.memory_space<vmem>>, %arg5: memref<1x1x1xf32, #tpu.memory_space<vmem>>, %arg6: memref<1x1x1xf32, #tpu.memory_space<vmem>>) attributes {dimension_semantics = [#tpu.dimension_semantics<parallel>], iteration_bounds = array<i64: 2>, scalar_prefetch = 0 : i64, scratch_operands = 0 : i64, tpu.core_type = #tpu.core_type<tc>, window_params = [{transform_indices = @transform_0, window_bounds = array<i64: 1, 4, 8, 64>}, {transform_indices = @transform_1, window_bounds = array<i64: 1, 4, 8, 64>}, {pipeline_mode = #tpu.pipeline_mode<synchronous>, transform_indices = @transform_2, window_bounds = array<i64: 1, 64>}, {pipeline_mode = #tpu.pipeline_mode<synchronous>, transform_indices = @transform_3, window_bounds = array<i64: 1, 64>}, {transform_indices = @transform_4, window_bounds = array<i64: 1, 1, 1>}, {transform_indices = @transform_5, window_bounds = array<i64: 1, 1, 1>}]} {
    %c0 = arith.constant 0 : index
    %c0_0 = arith.constant 0 : index
    %c0_1 = arith.constant 0 : index
    %c0_2 = arith.constant 0 : index
    %0 = vector.load %arg1[%c0, %c0_0, %c0_1, %c0_2] : memref<1x4x8x64xf32, #tpu.memory_space<vmem>>, vector<1x4x8x64xf32>
    %1 = vector.shape_cast %0 : vector<1x4x8x64xf32> to vector<4x8x64xf32>
    %c0_3 = arith.constant 0 : index
    %c0_4 = arith.constant 0 : index
    %c0_5 = arith.constant 0 : index
    %c0_6 = arith.constant 0 : index
    %2 = vector.load %arg2[%c0_3, %c0_4, %c0_5, %c0_6] : memref<1x4x8x64xf32, #tpu.memory_space<vmem>>, vector<1x4x8x64xf32>
    %3 = vector.shape_cast %2 : vector<1x4x8x64xf32> to vector<4x8x64xf32>
    %c0_7 = arith.constant 0 : index
    %c0_8 = arith.constant 0 : index
    %4 = vector.load %arg3[%c0_7, %c0_8] : memref<1x64xi32, #tpu.memory_space<vmem>>, vector<1x64xi32>
    %c0_9 = arith.constant 0 : index
    %c0_10 = arith.constant 0 : index
    %5 = vector.load %arg4[%c0_9, %c0_10] : memref<1x64xi32, #tpu.memory_space<vmem>>, vector<1x64xi32>
    %6 = arith.mulf %1, %3 : vector<4x8x64xf32>
    %cst = arith.constant dense<0.000000e+00> : vector<4x8xf32>
    %7 = vector.multi_reduction <add>, %6, %cst [2] : vector<4x8x64xf32> to vector<4x8xf32>
    %cst_11 = arith.constant dense<0.000000e+00> : vector<4xf32>
    %8 = vector.multi_reduction <add>, %7, %cst_11 [1] : vector<4x8xf32> to vector<4xf32>
    %9 = vector.shape_cast %8 : vector<4xf32> to vector<4x1xf32>
    %10 = arith.mulf %1, %1 : vector<4x8x64xf32>
    %cst_12 = arith.constant dense<0.000000e+00> : vector<4x8xf32>
    %11 = vector.multi_reduction <add>, %10, %cst_12 [2] : vector<4x8x64xf32> to vector<4x8xf32>
    %cst_13 = arith.constant dense<0.000000e+00> : vector<4xf32>
    %12 = vector.multi_reduction <add>, %11, %cst_13 [1] : vector<4x8xf32> to vector<4xf32>
    %13 = vector.shape_cast %12 : vector<4xf32> to vector<4x1xf32>
    %14 = arith.mulf %3, %3 : vector<4x8x64xf32>
    %cst_14 = arith.constant dense<0.000000e+00> : vector<4x8xf32>
    %15 = vector.multi_reduction <add>, %14, %cst_14 [2] : vector<4x8x64xf32> to vector<4x8xf32>
    %cst_15 = arith.constant dense<0.000000e+00> : vector<4xf32>
    %16 = vector.multi_reduction <add>, %15, %cst_15 [1] : vector<4x8xf32> to vector<4xf32>
    %17 = vector.shape_cast %16 : vector<4xf32> to vector<4x1xf32>
    %cst_16 = arith.constant 2.000000e+00 : f32
    %18 = vector.broadcast %cst_16 : f32 to vector<4x1xf32>
    %19 = arith.mulf %18, %9 : vector<4x1xf32>
    %20 = arith.addf %13, %17 : vector<4x1xf32>
    %cst_17 = arith.constant 9.99999974E-6 : f32
    %21 = vector.broadcast %cst_17 : f32 to vector<4x1xf32>
    %22 = arith.addf %20, %21 : vector<4x1xf32>
    %23 = arith.divf %19, %22 : vector<4x1xf32>
    %cst_18 = arith.constant 1.000000e+00 : f32
    %24 = vector.broadcast %cst_18 : f32 to vector<4x1xf32>
    %25 = arith.subf %24, %23 : vector<4x1xf32>
    %26 = vector.shape_cast %25 : vector<4x1xf32> to vector<1x4x1xf32>
    %cst_19 = arith.constant dense<0.000000e+00> : vector<1xf32>
    %27 = vector.multi_reduction <add>, %26, %cst_19 [1, 2] : vector<1x4x1xf32> to vector<1xf32>
    %28 = vector.shape_cast %27 : vector<1xf32> to vector<1x1x1xf32>
    %29 = vector.extract %28[0, 0, 0] : f32 from vector<1x1x1xf32>
    %30 = vector.broadcast %29 : f32 to vector<1x1xf32>
    %31 = vector.shape_cast %30 : vector<1x1xf32> to vector<1x1x1xf32>
    %c0_20 = arith.constant 0 : index
    %c0_21 = arith.constant 0 : index
    %c0_22 = arith.constant 0 : index
    %32 = vector.load %arg5[%c0_20, %c0_21, %c0_22] : memref<1x1x1xf32, #tpu.memory_space<vmem>>, vector<1x1x1xf32>
    tpu.vector_store %arg5[%c0_20, %c0_21, %c0_22], %31 {strides = array<i32>} : memref<1x1x1xf32, #tpu.memory_space<vmem>>, vector<1x1x1xf32>,
    %cst_23 = arith.constant 0.000000e+00 : f32
    %33 = vector.broadcast %cst_23 : f32 to vector<4x8x1xf32>
    %34 = tpu.concatenate %33, %3, %33 in 2 : vector<4x8x1xf32>, vector<4x8x64xf32>, vector<4x8x1xf32> -> vector<4x8x66xf32>
    %cst_24 = arith.constant 0.000000e+00 : f32
    %35 = vector.broadcast %cst_24 : f32 to vector<4x8x64xf32>
    %36 = vector.extract_strided_slice %34 {offsets = [0, 0, 0], sizes = [4, 8, 64], strides = [1, 1, 1]} : vector<4x8x66xf32> to vector<4x8x64xf32>
    %c-1_i32 = arith.constant -1 : i32
    %37 = vector.broadcast %c-1_i32 : i32 to vector<1x64xi32>
    %38 = arith.addi %4, %37 : vector<1x64xi32>
    %c0_i32 = arith.constant 0 : i32
    %39 = vector.broadcast %c0_i32 : i32 to vector<1x64xi32>
    %40 = arith.cmpi sge, %38, %39 : vector<1x64xi32>
    %c-1_i32_25 = arith.constant -1 : i32
    %41 = vector.broadcast %c-1_i32_25 : i32 to vector<1x64xi32>
    %42 = arith.addi %4, %41 : vector<1x64xi32>
    %c7_i32 = arith.constant 7 : i32
    %43 = vector.broadcast %c7_i32 : i32 to vector<1x64xi32>
    %44 = arith.cmpi sle, %42, %43 : vector<1x64xi32>
    %45 = arith.andi %40, %44 : vector<1x64xi1>
    %cst_26 = arith.constant 0.000000e+00 : f32
    %46 = vector.shape_cast %45 : vector<1x64xi1> to vector<1x1x64xi1>
    %47 = vector.broadcast %46 : vector<1x1x64xi1> to vector<4x8x64xi1>
    %48 = vector.broadcast %cst_26 : f32 to vector<4x8x64xf32>
    %49 = arith.select %47, %36, %48 : vector<4x8x64xi1>, vector<4x8x64xf32>
    %50 = arith.addf %35, %49 : vector<4x8x64xf32>
    %51 = vector.extract_strided_slice %34 {offsets = [0, 0, 1], sizes = [4, 8, 64], strides = [1, 1, 1]} : vector<4x8x66xf32> to vector<4x8x64xf32>
    %52 = arith.addf %50, %51 : vector<4x8x64xf32>
    %53 = vector.extract_strided_slice %34 {offsets = [0, 0, 2], sizes = [4, 8, 64], strides = [1, 1, 1]} : vector<4x8x66xf32> to vector<4x8x64xf32>
    %c1_i32 = arith.constant 1 : i32
    %54 = vector.broadcast %c1_i32 : i32 to vector<1x64xi32>
    %55 = arith.addi %4, %54 : vector<1x64xi32>
    %c0_i32_27 = arith.constant 0 : i32
    %56 = vector.broadcast %c0_i32_27 : i32 to vector<1x64xi32>
    %57 = arith.cmpi sge, %55, %56 : vector<1x64xi32>
    %c1_i32_28 = arith.constant 1 : i32
    %58 = vector.broadcast %c1_i32_28 : i32 to vector<1x64xi32>
    %59 = arith.addi %4, %58 : vector<1x64xi32>
    %c7_i32_29 = arith.constant 7 : i32
    %60 = vector.broadcast %c7_i32_29 : i32 to vector<1x64xi32>
    %61 = arith.cmpi sle, %59, %60 : vector<1x64xi32>
    %62 = arith.andi %57, %61 : vector<1x64xi1>
    %cst_30 = arith.constant 0.000000e+00 : f32
    %63 = vector.shape_cast %62 : vector<1x64xi1> to vector<1x1x64xi1>
    %64 = vector.broadcast %63 : vector<1x1x64xi1> to vector<4x8x64xi1>
    %65 = vector.broadcast %cst_30 : f32 to vector<4x8x64xf32>
    %66 = arith.select %64, %53, %65 : vector<4x8x64xi1>, vector<4x8x64xf32>
    %67 = arith.addf %52, %66 : vector<4x8x64xf32>
    %cst_31 = arith.constant 0.000000e+00 : f32
    %68 = vector.broadcast %cst_31 : f32 to vector<4x8x8xf32>
    %69 = tpu.concatenate %68, %67, %68 in 2 : vector<4x8x8xf32>, vector<4x8x64xf32>, vector<4x8x8xf32> -> vector<4x8x80xf32>
    %cst_32 = arith.constant 0.000000e+00 : f32
    %70 = vector.broadcast %cst_32 : f32 to vector<4x8x64xf32>
    %71 = vector.extract_strided_slice %69 {offsets = [0, 0, 0], sizes = [4, 8, 64], strides = [1, 1, 1]} : vector<4x8x80xf32> to vector<4x8x64xf32>
    %c-1_i32_33 = arith.constant -1 : i32
    %72 = vector.broadcast %c-1_i32_33 : i32 to vector<1x64xi32>
    %73 = arith.addi %5, %72 : vector<1x64xi32>
    %c0_i32_34 = arith.constant 0 : i32
    %74 = vector.broadcast %c0_i32_34 : i32 to vector<1x64xi32>
    %75 = arith.cmpi sge, %73, %74 : vector<1x64xi32>
    %c-1_i32_35 = arith.constant -1 : i32
    %76 = vector.broadcast %c-1_i32_35 : i32 to vector<1x64xi32>
    %77 = arith.addi %5, %76 : vector<1x64xi32>
    %c7_i32_36 = arith.constant 7 : i32
    %78 = vector.broadcast %c7_i32_36 : i32 to vector<1x64xi32>
    %79 = arith.cmpi sle, %77, %78 : vector<1x64xi32>
    %80 = arith.andi %75, %79 : vector<1x64xi1>
    %cst_37 = arith.constant 0.000000e+00 : f32
    %81 = vector.shape_cast %80 : vector<1x64xi1> to vector<1x1x64xi1>
    %82 = vector.broadcast %81 : vector<1x1x64xi1> to vector<4x8x64xi1>
    %83 = vector.broadcast %cst_37 : f32 to vector<4x8x64xf32>
    %84 = arith.select %82, %71, %83 : vector<4x8x64xi1>, vector<4x8x64xf32>
    %85 = arith.addf %70, %84 : vector<4x8x64xf32>
    %86 = vector.extract_strided_slice %69 {offsets = [0, 0, 8], sizes = [4, 8, 64], strides = [1, 1, 1]} : vector<4x8x80xf32> to vector<4x8x64xf32>
    %87 = arith.addf %85, %86 : vector<4x8x64xf32>
    %88 = vector.extract_strided_slice %69 {offsets = [0, 0, 16], sizes = [4, 8, 64], strides = [1, 1, 1]} : vector<4x8x80xf32> to vector<4x8x64xf32>
    %c1_i32_38 = arith.constant 1 : i32
    %89 = vector.broadcast %c1_i32_38 : i32 to vector<1x64xi32>
    %90 = arith.addi %5, %89 : vector<1x64xi32>
    %c0_i32_39 = arith.constant 0 : i32
    %91 = vector.broadcast %c0_i32_39 : i32 to vector<1x64xi32>
    %92 = arith.cmpi sge, %90, %91 : vector<1x64xi32>
    %c1_i32_40 = arith.constant 1 : i32
    %93 = vector.broadcast %c1_i32_40 : i32 to vector<1x64xi32>
    %94 = arith.addi %5, %93 : vector<1x64xi32>
    %c7_i32_41 = arith.constant 7 : i32
    %95 = vector.broadcast %c7_i32_41 : i32 to vector<1x64xi32>
    %96 = arith.cmpi sle, %94, %95 : vector<1x64xi32>
    %97 = arith.andi %92, %96 : vector<1x64xi1>
    %cst_42 = arith.constant 0.000000e+00 : f32
    %98 = vector.shape_cast %97 : vector<1x64xi1> to vector<1x1x64xi1>
    %99 = vector.broadcast %98 : vector<1x1x64xi1> to vector<4x8x64xi1>
    %100 = vector.broadcast %cst_42 : f32 to vector<4x8x64xf32>
    %101 = arith.select %99, %88, %100 : vector<4x8x64xi1>, vector<4x8x64xf32>
    %102 = arith.addf %87, %101 : vector<4x8x64xf32>
    %cst_43 = arith.constant 0.000000e+00 : f32
    %103 = vector.broadcast %cst_43 : f32 to vector<4x1x64xf32>
    %104 = tpu.concatenate %103, %102, %103 in 1 : vector<4x1x64xf32>, vector<4x8x64xf32>, vector<4x1x64xf32> -> vector<4x10x64xf32>
    %cst_44 = arith.constant 0.000000e+00 : f32
    %105 = vector.broadcast %cst_44 : f32 to vector<4x8x64xf32>
    %106 = vector.extract_strided_slice %104 {offsets = [0, 0, 0], sizes = [4, 8, 64], strides = [1, 1, 1]} : vector<4x10x64xf32> to vector<4x8x64xf32>
    %107 = arith.addf %105, %106 : vector<4x8x64xf32>
    %108 = vector.extract_strided_slice %104 {offsets = [0, 1, 0], sizes = [4, 8, 64], strides = [1, 1, 1]} : vector<4x10x64xf32> to vector<4x8x64xf32>
    %109 = arith.addf %107, %108 : vector<4x8x64xf32>
    %110 = vector.extract_strided_slice %104 {offsets = [0, 2, 0], sizes = [4, 8, 64], strides = [1, 1, 1]} : vector<4x10x64xf32> to vector<4x8x64xf32>
    %111 = arith.addf %109, %110 : vector<4x8x64xf32>
    %cst_45 = arith.constant 0.0370370373 : f32
    %112 = vector.broadcast %cst_45 : f32 to vector<4x8x64xf32>
    %113 = arith.mulf %111, %112 : vector<4x8x64xf32>
    %cst_46 = arith.constant 1.000000e-07 : f32
    %114 = vector.broadcast %cst_46 : f32 to vector<4x8x64xf32>
    %115 = arith.cmpf oge, %113, %114 : vector<4x8x64xf32>
    %cst_47 = arith.constant 0.99999988 : f32
    %116 = vector.broadcast %cst_47 : f32 to vector<4x8x64xf32>
    %117 = arith.cmpf ole, %113, %116 : vector<4x8x64xf32>
    %118 = arith.andi %115, %117 : vector<4x8x64xi1>
    %119 = arith.extui %118 : vector<4x8x64xi1> to vector<4x8x64xi32>
    %120 = arith.sitofp %119 : vector<4x8x64xi32> to vector<4x8x64xf32>
    %cst_48 = arith.constant dense<0xFF800000> : vector<8x64xf32>
    %121 = vector.multi_reduction <maximumf>, %120, %cst_48 [0] : vector<4x8x64xf32> to vector<8x64xf32>
    %cst_49 = arith.constant 2.000000e+00 : f32
    %122 = vector.broadcast %cst_49 : f32 to vector<8x64xf32>
    %123 = arith.mulf %121, %122 : vector<8x64xf32>
    %cst_50 = arith.constant 1.000000e-07 : f32
    %cst_51 = arith.constant 1.000000e+00 : f32
    %124 = vector.broadcast %cst_50 : f32 to vector<4x8x64xf32>
    %125 = arith.maximumf %124, %1 : vector<4x8x64xf32>
    %126 = vector.broadcast %cst_51 : f32 to vector<4x8x64xf32>
    %127 = arith.minimumf %126, %125 : vector<4x8x64xf32>
    %cst_52 = arith.constant 0.000000e+00 : f32
    %128 = vector.broadcast %cst_52 : f32 to vector<4x8x64xf32>
    %129 = arith.subf %128, %3 : vector<4x8x64xf32>
    %130 = math.log %127 : vector<4x8x64xf32>
    %131 = arith.mulf %129, %130 : vector<4x8x64xf32>
    %cst_53 = arith.constant dense<0.000000e+00> : vector<8x64xf32>
    %132 = vector.multi_reduction <add>, %131, %cst_53 [0] : vector<4x8x64xf32> to vector<8x64xf32>
    %cst_54 = arith.constant 1.000000e+00 : f32
    %133 = vector.broadcast %cst_54 : f32 to vector<8x64xf32>
    %134 = arith.addf %133, %123 : vector<8x64xf32>
    %135 = arith.mulf %132, %134 : vector<8x64xf32>
    %136 = vector.shape_cast %135 : vector<8x64xf32> to vector<1x8x64xf32>
    %cst_55 = arith.constant dense<0.000000e+00> : vector<1xf32>
    %137 = vector.multi_reduction <add>, %136, %cst_55 [1, 2] : vector<1x8x64xf32> to vector<1xf32>
    %138 = vector.shape_cast %137 : vector<1xf32> to vector<1x1x1xf32>
    %139 = vector.extract %138[0, 0, 0] : f32 from vector<1x1x1xf32>
    %140 = vector.broadcast %139 : f32 to vector<1x1xf32>
    %141 = vector.shape_cast %140 : vector<1x1xf32> to vector<1x1x1xf32>
    %c0_56 = arith.constant 0 : index
    %c0_57 = arith.constant 0 : index
    %c0_58 = arith.constant 0 : index
    %142 = vector.load %arg6[%c0_56, %c0_57, %c0_58] : memref<1x1x1xf32, #tpu.memory_space<vmem>>, vector<1x1x1xf32>
    tpu.vector_store %arg6[%c0_56, %c0_57, %c0_58], %141 {strides = array<i32>} : memref<1x1x1xf32, #tpu.memory_space<vmem>>, vector<1x1x1xf32>,
    return
  }
  func.func @transform_0(%arg0: i32) -> (i32, i32, i32, i32) {
    %c0_i32 = arith.constant 0 : i32
    %c0_i32_0 = arith.constant 0 : i32
    %c0_i32_1 = arith.constant 0 : i32
    %c0_i32_2 = arith.constant 0 : i32
    return %arg0, %c0_i32, %c0_i32_0, %c0_i32_1 : i32, i32, i32, i32
  }
  func.func @transform_1(%arg0: i32) -> (i32, i32, i32, i32) {
    %c0_i32 = arith.constant 0 : i32
    %c0_i32_0 = arith.constant 0 : i32
    %c0_i32_1 = arith.constant 0 : i32
    %c0_i32_2 = arith.constant 0 : i32
    return %arg0, %c0_i32, %c0_i32_0, %c0_i32_1 : i32, i32, i32, i32
  }
  func.func @transform_2(%arg0: i32) -> (i32, i32) {
    %c0_i32 = arith.constant 0 : i32
    %c0_i32_0 = arith.constant 0 : i32
    %c0_i32_1 = arith.constant 0 : i32
    return %c0_i32, %c0_i32_0 : i32, i32
  }
  func.func @transform_3(%arg0: i32) -> (i32, i32) {
    %c0_i32 = arith.constant 0 : i32
    %c0_i32_0 = arith.constant 0 : i32
    %c0_i32_1 = arith.constant 0 : i32
    return %c0_i32, %c0_i32_0 : i32, i32
  }
  func.func @transform_4(%arg0: i32) -> (i32, i32, i32) {
    %c0_i32 = arith.constant 0 : i32
    %c0_i32_0 = arith.constant 0 : i32
    %c0_i32_1 = arith.constant 0 : i32
    return %arg0, %c0_i32, %c0_i32_0 : i32, i32, i32
  }
  func.func @transform_5(%arg0: i32) -> (i32, i32, i32) {
    %c0_i32 = arith.constant 0 : i32
    %c0_i32_0 = arith.constant 0 : i32
    %c0_i32_1 = arith.constant 0 : i32
    return %arg0, %c0_i32, %c0_i32_0 : i32, i32, i32
  }
}

</mosaic_0001>

<llo_original>
// kernel: tpu_custom_call.1
$region0: #{tpu_custom_call.1}
  #allocation0 [shape = 'u32[]', space=smem, size = 0x4, offset = 0x4, fixed_abs, tag = 'smem constant byte address 0x4 - core index']
  #allocation1 [shape = 'u32[144,128]{1,0:T(1,128)}', space=vmem, size = 0x12000, scoped, tag = 'internal scratch']
  %s0 = inlined_call_operand.hbm [shape: f32[2,4,8,64], index: 0, kind: input, shape index: {}]
  %s1 = inlined_call_operand.hbm [shape: f32[2,4,8,64], index: 1, kind: input, shape index: {}]
  %s2 = inlined_call_operand.vmem [shape: s32[1,64], index: 2, kind: input, shape index: {}]
  %s3 = inlined_call_operand.vmem [shape: s32[1,64], index: 3, kind: input, shape index: {}]
  %s4 = inlined_call_operand.vmem [shape: f32[2,1,1], index: 4, kind: output, shape index: {0}]
  %s5 = inlined_call_operand.vmem [shape: f32[2,1,1], index: 5, kind: output, shape index: {1}]
  %6 = xla_tuple %s4, %s5
  %s7 = sld [smem:[#allocation0]]
  $region65: #{tpu_custom_call.1} parent=0
    _
  %s9 = ssub.s32 1, %s7
  %s10 = scalar_select 0, %s9, %s7
  $region1: #{tpu_custom_call.1} parent=0
    #allocation2 [shape = 'u8[32768]{0}', space=vmem, size = 0x8000, scoped, tag = 'input window, operand 0']
    #allocation3 [shape = 's32[2]{0}', space=sflag, size = 0x8, scoped, tag = 'scoped memory for tpu_custom_call.1']
    #allocation4 [shape = 'u8[32768]{0}', space=vmem, size = 0x8000, scoped, tag = 'input window, operand 1']
    #allocation5 [shape = 's32[2]{0}', space=sflag, size = 0x8, scoped, tag = 'scoped memory for tpu_custom_call.1']
    %11 = vsyncpa [#allocation3], 0
    %s12 = scalar_lea.sflag [#allocation3], 1
    %13 = vsyncpa %s12, 0
    %14 = vsyncpa [#allocation5], 0
    %s15 = scalar_lea.sflag [#allocation5], 1
    %16 = vsyncpa %s15, 0
    loop: start=0, step=1, limit=4
    $region2: #{tpu_custom_call.1} parent=1 // loop_pre_header
      _
    $region3: #{tpu_custom_call.1} parent=1 // loop_header
      %s18 = sphi 0, %s22
      %p19 = scmp.ge.s32.totalorder %s18, 4
      %s28 = sphi 0, %s30
      %s31 = sphi 0, %s28
      %s32 = sphi 0, %s31
      %s48 = sphi 0, %s32
      %s54 = sphi 0, %s56
      %s57 = sphi 0, %s54
      %s58 = sphi 0, %s57
      %s74 = sphi 0, %s58
      %s78 = sphi 0, %s78
      %s80 = sphi 0, %s78
      %s81 = sphi 0, %s80
      %s95 = sphi 0, %s81
      %s99 = sphi 0, %s99
      %s101 = sphi 0, %s99
      %s102 = sphi 0, %s101
      %s116 = sphi 0, %s102
      %s122 = sphi 0, %s124
      %s125 = sphi 0, %s122
      %s126 = sphi 0, %s125
      %s142 = sphi 0, %s126
      %s148 = sphi 0, %s150
      %s151 = sphi 0, %s148
      %s152 = sphi 0, %s151
      %s168 = sphi 0, %s152
    $region4: #{tpu_custom_call.1} parent=1 // loop_header_branch
      %21 = sbr.rel (%p19) target = $region8
    $region5: #{tpu_custom_call.1} parent=1 // loop_body
      %s23 = ssub.s32 %s18, 1
      %s24 = ssub.s32 %s18, 2
      %s25 = sadd.s32 %s18, 1
      %s26 = ssub.s32 %s18, %s25
      %p27 = scmp.eq.s32.totalorder %s26, 0
      %s29 = sadd.s32 %s28, 1
      %s30 = scalar_select %p27, %s28, %s29
      %p33 = pneg %p27
      %p34 = scmp.eq.s32.totalorder %s18, 1
      %p35 = por %p33, %p34
      %p36 = scmp.ne.s32.totalorder %s28, %s31
      %p37 = scmp.eq.s32.totalorder %s18, 0
      %p38 = por %p36, %p37
      %p39 = scmp.ne.s32.totalorder %s28, %s31
      %p40 = scmp.eq.s32.totalorder %s23, 1
      %p41 = por %p39, %p40
      %p42 = scmp.ne.s32.totalorder %s31, %s32
      %p43 = scmp.eq.s32.totalorder %s23, 0
      %p44 = por %p42, %p43
      %p45 = scmp.ne.s32.totalorder %s31, %s32
      %p46 = scmp.eq.s32.totalorder %s24, 1
      %p47 = por %p45, %p46
      %p49 = scmp.ne.s32.totalorder %s32, %s48
      %p50 = scmp.eq.s32.totalorder %s24, 0
      %p51 = por %p49, %p50
      %s52 = ssub.s32 %s18, %s25
      %p53 = scmp.eq.s32.totalorder %s52, 0
      %s55 = sadd.s32 %s54, 1
      %s56 = scalar_select %p53, %s54, %s55
      %p59 = pneg %p53
      %p60 = scmp.eq.s32.totalorder %s18, 1
      %p61 = por %p59, %p60
      %p62 = scmp.ne.s32.totalorder %s54, %s57
      %p63 = scmp.eq.s32.totalorder %s18, 0
      %p64 = por %p62, %p63
      %p65 = scmp.ne.s32.totalorder %s54, %s57
      %p66 = scmp.eq.s32.totalorder %s23, 1
      %p67 = por %p65, %p66
      %p68 = scmp.ne.s32.totalorder %s57, %s58
      %p69 = scmp.eq.s32.totalorder %s23, 0
      %p70 = por %p68, %p69
      %p71 = scmp.ne.s32.totalorder %s57, %s58
      %p72 = scmp.eq.s32.totalorder %s24, 1
      %p73 = por %p71, %p72
      %p75 = scmp.ne.s32.totalorder %s58, %s74
      %p76 = scmp.eq.s32.totalorder %s24, 0
      %p77 = por %p75, %p76
      %s79 = sadd.s32 %s78, 1
      %p82 = scmp.eq.s32.totalorder %s18, 1
      %p83 = scmp.ne.s32.totalorder %s78, %s80
      %p84 = scmp.eq.s32.totalorder %s18, 0
      %p85 = por %p83, %p84
      %p86 = scmp.ne.s32.totalorder %s78, %s80
      %p87 = scmp.eq.s32.totalorder %s23, 1
      %p88 = por %p86, %p87
      %p89 = scmp.ne.s32.totalorder %s80, %s81
      %p90 = scmp.eq.s32.totalorder %s23, 0
      %p91 = por %p89, %p90
      %p92 = scmp.ne.s32.totalorder %s80, %s81
      %p93 = scmp.eq.s32.totalorder %s24, 1
      %p94 = por %p92, %p93
      %p96 = scmp.ne.s32.totalorder %s81, %s95
      %p97 = scmp.eq.s32.totalorder %s24, 0
      %p98 = por %p96, %p97
      %s100 = sadd.s32 %s99, 1
      %p103 = scmp.eq.s32.totalorder %s18, 1
      %p104 = scmp.ne.s32.totalorder %s99, %s101
      %p105 = scmp.eq.s32.totalorder %s18, 0
      %p106 = por %p104, %p105
      %p107 = scmp.ne.s32.totalorder %s99, %s101
      %p108 = scmp.eq.s32.totalorder %s23, 1
      %p109 = por %p107, %p108
      %p110 = scmp.ne.s32.totalorder %s101, %s102
      %p111 = scmp.eq.s32.totalorder %s23, 0
      %p112 = por %p110, %p111
      %p113 = scmp.ne.s32.totalorder %s101, %s102
      %p114 = scmp.eq.s32.totalorder %s24, 1
      %p115 = por %p113, %p114
      %p117 = scmp.ne.s32.totalorder %s102, %s116
      %p118 = scmp.eq.s32.totalorder %s24, 0
      %p119 = por %p117, %p118
      %s120 = ssub.s32 %s18, %s25
      %p121 = scmp.eq.s32.totalorder %s120, 0
      %s123 = sadd.s32 %s122, 1
      %s124 = scalar_select %p121, %s122, %s123
      %p127 = pneg %p121
      %p128 = scmp.eq.s32.totalorder %s18, 1
      %p129 = por %p127, %p128
      %p130 = scmp.ne.s32.totalorder %s122, %s125
      %p131 = scmp.eq.s32.totalorder %s18, 0
      %p132 = por %p130, %p131
      %p133 = scmp.ne.s32.totalorder %s122, %s125
      %p134 = scmp.eq.s32.totalorder %s23, 1
      %p135 = por %p133, %p134
      %p136 = scmp.ne.s32.totalorder %s125, %s126
      %p137 = scmp.eq.s32.totalorder %s23, 0
      %p138 = por %p136, %p137
      %p139 = scmp.ne.s32.totalorder %s125, %s126
      %p140 = scmp.eq.s32.totalorder %s24, 1
      %p141 = por %p139, %p140
      %p143 = scmp.ne.s32.totalorder %s126, %s142
      %p144 = scmp.eq.s32.totalorder %s24, 0
      %p145 = por %p143, %p144
      %s146 = ssub.s32 %s18, %s25
      %p147 = scmp.eq.s32.totalorder %s146, 0
      %s149 = sadd.s32 %s148, 1
      %s150 = scalar_select %p147, %s148, %s149
      %p153 = pneg %p147
      %p154 = scmp.eq.s32.totalorder %s18, 1
      %p155 = por %p153, %p154
      %p156 = scmp.ne.s32.totalorder %s148, %s151
      %p157 = scmp.eq.s32.totalorder %s18, 0
      %p158 = por %p156, %p157
      %p159 = scmp.ne.s32.totalorder %s148, %s151
      %p160 = scmp.eq.s32.totalorder %s23, 1
      %p161 = por %p159, %p160
      %p162 = scmp.ne.s32.totalorder %s151, %s152
      %p163 = scmp.eq.s32.totalorder %s23, 0
      %p164 = por %p162, %p163
      %p165 = scmp.ne.s32.totalorder %s151, %s152
      %p166 = scmp.eq.s32.totalorder %s24, 1
      %p167 = por %p165, %p166
      %p169 = scmp.ne.s32.totalorder %s152, %s168
      %p170 = scmp.eq.s32.totalorder %s24, 0
      %p171 = por %p169, %p170
      %p172 = scmp.le.s32.totalorder 1, %s18
      %p173 = scmp.lt.s32.totalorder %s18, 3
      %p174 = pnand %p172, %p173
      %p175 = pneg %p174
      // Predicated region
      $region9: #{tpu_custom_call.1} parent=5 // pred_check
        _
      $region10: #{tpu_custom_call.1} parent=5 // pred_check_branch
        %177 = sbr.rel (%p174) target = $region12
      $region11: #{tpu_custom_call.1} parent=5 // pred_region
        %s178 = ssub.s32 %s18, 1
        // Predicated region
        $region13: #{tpu_custom_call.1} parent=11 // pred_check
          %p179 = pneg %p91
        $region14: #{tpu_custom_call.1} parent=11 // pred_check_branch
          %181 = sbr.rel (%p179) target = $region16
        $region15: #{tpu_custom_call.1} parent=11 // pred_region
          _
        $region16: #{tpu_custom_call.1} parent=11 // pred_fallthru
          _
        // Predicated region
        $region17: #{tpu_custom_call.1} parent=11 // pred_check
          %p182 = pneg %p112
        $region18: #{tpu_custom_call.1} parent=11 // pred_check_branch
          %184 = sbr.rel (%p182) target = $region20
        $region19: #{tpu_custom_call.1} parent=11 // pred_region
          _
        $region20: #{tpu_custom_call.1} parent=11 // pred_fallthru
          _
      $region12: #{tpu_custom_call.1} parent=5 // pred_fallthru
        _
      %p185 = scmp.lt.s32.totalorder %s18, 2
      // Predicated region
      $region21: #{tpu_custom_call.1} parent=5 // pred_check
        %p186 = pneg %p185
      $region22: #{tpu_custom_call.1} parent=5 // pred_check_branch
        %188 = sbr.rel (%p186) target = $region24
      $region23: #{tpu_custom_call.1} parent=5 // pred_region
        // Predicated region
        $region25: #{tpu_custom_call.1} parent=23 // pred_check
          %p189 = pneg %p38
        $region26: #{tpu_custom_call.1} parent=23 // pred_check_branch
          %191 = sbr.rel (%p189) target = $region28
        $region27: #{tpu_custom_call.1} parent=23 // pred_region
          %s192 = sand.u32 %s28, 1
          %s193 = scalar_lea.sflag [#allocation3], %s192
          %s194 = sand.u32 %s28, 1
          %s195 = smul.addr %s194, 32
          %s196 = scalar_lea.vmem [#allocation2], %s195
          %s198 = ssub.s32 512, 512
          %199 = vsyncadd %s193, %s198
          %s200 = smul.addr %s18, 4
          %s201 = smul.addr %s200, 128
          %s202 = scalar_lea.hbm %s0, %s201
          %s203 = sshll.u32 %s196, 4
          %s204 = int_to_ptr.vmem [resolvable:$true] %s203
          %209 = dma.hbm_to_vmem [thread:$0]  %s202, 512, %s204, %s193, 128, 128, 8
        $region28: #{tpu_custom_call.1} parent=23 // pred_fallthru
          _
        // Predicated region
        $region29: #{tpu_custom_call.1} parent=23 // pred_check
          %p210 = pneg %p64
        $region30: #{tpu_custom_call.1} parent=23 // pred_check_branch
          %212 = sbr.rel (%p210) target = $region32
        $region31: #{tpu_custom_call.1} parent=23 // pred_region
          %s213 = sand.u32 %s54, 1
          %s214 = scalar_lea.sflag [#allocation5], %s213
          %s215 = sand.u32 %s54, 1
          %s216 = smul.addr %s215, 32
          %s217 = scalar_lea.vmem [#allocation4], %s216
          %s219 = ssub.s32 512, 512
          %220 = vsyncadd %s214, %s219
          %s221 = smul.addr %s18, 4
          %s222 = smul.addr %s221, 128
          %s223 = scalar_lea.hbm %s1, %s222
          %s224 = sshll.u32 %s217, 4
          %s225 = int_to_ptr.vmem [resolvable:$true] %s224
          %230 = dma.hbm_to_vmem [thread:$0]  %s223, 512, %s225, %s214, 128, 128, 8
        $region32: #{tpu_custom_call.1} parent=23 // pred_fallthru
          _
      $region24: #{tpu_custom_call.1} parent=5 // pred_fallthru
        _
      %p231 = scmp.le.s32.totalorder 1, %s18
      %p232 = scmp.lt.s32.totalorder %s18, 3
      %p233 = pnand %p231, %p232
      %p234 = pneg %p233
      // Predicated region
      $region33: #{tpu_custom_call.1} parent=5 // pred_check
        _
      $region34: #{tpu_custom_call.1} parent=5 // pred_check_branch
        %236 = sbr.rel (%p233) target = $region36
      $region35: #{tpu_custom_call.1} parent=5 // pred_region
        %s237 = ssub.s32 %s18, 1
        %s238 = sand.u32 %s31, 1
        %s239 = scalar_lea.sflag [#allocation3], %s238
        %s240 = sand.u32 %s31, 1
        %s241 = smul.addr %s240, 32
        %s242 = scalar_lea.vmem [#allocation2], %s241
        // Predicated region
        $region37: #{tpu_custom_call.1} parent=35 // pred_check
          %p243 = pneg %p44
        $region38: #{tpu_custom_call.1} parent=35 // pred_check_branch
          %245 = sbr.rel (%p243) target = $region40
        $region39: #{tpu_custom_call.1} parent=35 // pred_region
          %246 = dma.done %s239, 512
        $region40: #{tpu_custom_call.1} parent=35 // pred_fallthru
          _
        %s247 = sand.u32 %s57, 1
        %s248 = scalar_lea.sflag [#allocation5], %s247
        %s249 = sand.u32 %s57, 1
        %s250 = smul.addr %s249, 32
        %s251 = scalar_lea.vmem [#allocation4], %s250
        // Predicated region
        $region41: #{tpu_custom_call.1} parent=35 // pred_check
          %p252 = pneg %p70
        $region42: #{tpu_custom_call.1} parent=35 // pred_check_branch
          %254 = sbr.rel (%p252) target = $region44
        $region43: #{tpu_custom_call.1} parent=35 // pred_region
          %255 = dma.done %s248, 512
        $region44: #{tpu_custom_call.1} parent=35 // pred_fallthru
          _
        %s256 = sand.u32 %s31, 1
        %s257 = scalar_lea.sflag [#allocation3], %s256
        %s258 = sand.u32 %s31, 1
        %s259 = smul.addr %s258, 32
        %s260 = scalar_lea.vmem [#allocation2], %s259
        %p261 = pneg %p44
        %p262 = pneg %p41
        %s263 = sand.u32 %s57, 1
        %s264 = scalar_lea.sflag [#allocation5], %s263
        %s265 = sand.u32 %s57, 1
        %s266 = smul.addr %s265, 32
        %s267 = scalar_lea.vmem [#allocation4], %s266
        %p268 = pneg %p70
        %p269 = pneg %p67
        %p270 = pneg %p91
        %p271 = pneg %p88
        %p272 = pneg %p112
        %p273 = pneg %p109
        %p274 = pneg %p138
        %p275 = pneg %p135
        %p276 = scmp.lt.s32.totalorder %s23, 1
        %s277 = scalar_select %p276, %s23, 1
        %s278 = scalar_lea.vmem %s4, %s277
        %p279 = pneg %p164
        %p280 = pneg %p161
        %p281 = scmp.lt.s32.totalorder %s23, 1
        %s282 = scalar_select %p281, %s23, 1
        %s283 = scalar_lea.vmem %s5, %s282
        %p284 = scmp.lt.s32.totalorder %s23, 1
        %s285 = scalar_select %p284, %s23, 1
        %s286 = scalar_lea.vmem %s4, %s285
        %p287 = scmp.lt.s32.totalorder %s23, 1
        %s288 = scalar_select %p287, %s23, 1
        %s289 = scalar_lea.vmem %s5, %s288
        %v290 = vld [vmem:[%s242] sm:$0xff]
        %v291 = vld [vmem:[%s242 + $0x8] sm:$0xff]
        %v292 = vld [vmem:[%s242 + $0x10] sm:$0xff]
        %v293 = vld [vmem:[%s242 + $0x18] sm:$0xff]
        %v294 = vld [vmem:[%s251] sm:$0xff]
        %v295 = vld [vmem:[%s251 + $0x8] sm:$0xff]
        %v296 = vld [vmem:[%s251 + $0x10] sm:$0xff]
        %v297 = vld [vmem:[%s251 + $0x18] sm:$0xff]
        %v298 = vld [vmem:[%s2] sm:$0x1]
        %v299 = vld [vmem:[%s3] sm:$0x1]
        %v300 = vmul.f32 %v290, %v294
        %v301 = vmul.f32 %v291, %v295
        %v302 = vmul.f32 %v292, %v296
        %v303 = vmul.f32 %v293, %v297
        %vm304 = vcmask 523264
        %v305 = vsel %vm304, %v300, 0.0
        %306 = vadd.xlane.f32.xlu0 %v305
        %v307 = vpop.xlane.xlu0 %306
        %v308 = vsel %vm304, %v301, 0.0
        %309 = vadd.xlane.f32.xlu0 %v308
        %v310 = vpop.xlane.xlu0 %309
        %v311 = vsel %vm304, %v302, 0.0
        %312 = vadd.xlane.f32.xlu0 %v311
        %v313 = vpop.xlane.xlu0 %312
        %v314 = vsel %vm304, %v303, 0.0
        %315 = vadd.xlane.f32.xlu0 %v314
        %v316 = vpop.xlane.xlu0 %315
        %v321 = vlaneseq
        %v322 = vand.u32 %v321, 127
        %v323 = vlaneseq
        %v324 = vshrl.u32 %v323, 7
        %v325 = vsub.s32 %v322, %v324
        %v326 = vrot.slane %v307, %v325
        %v327 = vlaneseq
        %v328 = vshrl.u32 %v327, 7
        %v329 = vsub.s32 %v322, %v328
        %v330 = vrot.slane %v310, %v329
        %v331 = vlaneseq
        %v332 = vshrl.u32 %v331, 7
        %v333 = vsub.s32 %v322, %v332
        %v334 = vrot.slane %v313, %v333
        %v335 = vlaneseq
        %v336 = vshrl.u32 %v335, 7
        %v337 = vsub.s32 %v322, %v336
        %v338 = vrot.slane %v316, %v337
        %vm339 = vcmask 1041409
        %v340 = vsel %vm339, %v330, %v326
        %vm341 = vcmask 1042434
        %v342 = vsel %vm341, %v334, %v340
        %vm343 = vcmask 1043459
        %v344 = vsel %vm343, %v338, %v342
        %vm346 = vcmask 60416
        %v347 = vsel %vm346, %v344, 0.0
        %348 = vadd.xlane.f32.xlu0 %v347
        %v349 = vpop.xlane.xlu0 %348
        %v350 = vmul.f32 %v290, %v290
        %v351 = vmul.f32 %v291, %v291
        %v352 = vmul.f32 %v292, %v292
        %v353 = vmul.f32 %v293, %v293
        %v354 = vsel %vm304, %v350, 0.0
        %355 = vadd.xlane.f32.xlu0 %v354
        %v356 = vpop.xlane.xlu0 %355
        %v357 = vsel %vm304, %v351, 0.0
        %358 = vadd.xlane.f32.xlu0 %v357
        %v359 = vpop.xlane.xlu0 %358
        %v360 = vsel %vm304, %v352, 0.0
        %361 = vadd.xlane.f32.xlu0 %v360
        %v362 = vpop.xlane.xlu0 %361
        %v363 = vsel %vm304, %v353, 0.0
        %364 = vadd.xlane.f32.xlu0 %v363
        %v365 = vpop.xlane.xlu0 %364
        %v370 = vlaneseq
        %v371 = vshrl.u32 %v370, 7
        %v372 = vsub.s32 %v322, %v371
        %v373 = vrot.slane %v356, %v372
        %v374 = vlaneseq
        %v375 = vshrl.u32 %v374, 7
        %v376 = vsub.s32 %v322, %v375
        %v377 = vrot.slane %v359, %v376
        %v378 = vlaneseq
        %v379 = vshrl.u32 %v378, 7
        %v380 = vsub.s32 %v322, %v379
        %v381 = vrot.slane %v362, %v380
        %v382 = vlaneseq
        %v383 = vshrl.u32 %v382, 7
        %v384 = vsub.s32 %v322, %v383
        %v385 = vrot.slane %v365, %v384
        %v386 = vsel %vm339, %v377, %v373
        %v387 = vsel %vm341, %v381, %v386
        %v388 = vsel %vm343, %v385, %v387
        %v390 = vsel %vm346, %v388, 0.0
        %391 = vadd.xlane.f32.xlu0 %v390
        %v392 = vpop.xlane.xlu0 %391
        %v393 = vmul.f32 %v294, %v294
        %v394 = vmul.f32 %v295, %v295
        %v395 = vmul.f32 %v296, %v296
        %v396 = vmul.f32 %v297, %v297
        %v397 = vsel %vm304, %v393, 0.0
        %398 = vadd.xlane.f32.xlu0 %v397
        %v399 = vpop.xlane.xlu0 %398
        %v400 = vsel %vm304, %v394, 0.0
        %401 = vadd.xlane.f32.xlu0 %v400
        %v402 = vpop.xlane.xlu0 %401
        %v403 = vsel %vm304, %v395, 0.0
        %404 = vadd.xlane.f32.xlu0 %v403
        %v405 = vpop.xlane.xlu0 %404
        %v406 = vsel %vm304, %v396, 0.0
        %407 = vadd.xlane.f32.xlu0 %v406
        %v408 = vpop.xlane.xlu0 %407
        %v413 = vlaneseq
        %v414 = vshrl.u32 %v413, 7
        %v415 = vsub.s32 %v322, %v414
        %v416 = vrot.slane %v399, %v415
        %v417 = vlaneseq
        %v418 = vshrl.u32 %v417, 7
        %v419 = vsub.s32 %v322, %v418
        %v420 = vrot.slane %v402, %v419
        %v421 = vlaneseq
        %v422 = vshrl.u32 %v421, 7
        %v423 = vsub.s32 %v322, %v422
        %v424 = vrot.slane %v405, %v423
        %v425 = vlaneseq
        %v426 = vshrl.u32 %v425, 7
        %v427 = vsub.s32 %v322, %v426
        %v428 = vrot.slane %v408, %v427
        %v429 = vsel %vm339, %v420, %v416
        %v430 = vsel %vm341, %v424, %v429
        %v431 = vsel %vm343, %v428, %v430
        %v433 = vsel %vm346, %v431, 0.0
        %434 = vadd.xlane.f32.xlu0 %v433
        %v435 = vpop.xlane.xlu0 %434
        %v436 = vmul.f32 %v349, 2.0
        %v437 = vadd.f32 %v392, %v435
        %v438 = vadd.f32 %v437, 1e-05
        %v439 = vrcp.pop %v438
        %v440 = vmul.f32 %v436, %v439
        %v441 = vsub.f32 1.0, %v440
        %vm442 = vcmask 3072
        %v443 = vsel %vm442, %v441, 0.0
        %444 = vadd.xlane.f32.xlu0 %v443
        %v445 = vpop.xlane.xlu0 %444
        %v446 = vrot.slane %v445, 4
        %v447 = vadd.f32 %v445, %v446
        %v448 = vrot.slane %v447, 2
        %v449 = vadd.f32 %v447, %v448
        %v450 = vrot.slane %v449, 1
        %v451 = vadd.f32 %v449, %v450
        %s452 = vtos %v451
        %v453 = vstv %s452
        %vm454 = vcmask 0
        %455 = vst.msk [vmem:[%s286] sm:$0x1] %vm454, %v453
        %460 = vrot.lane.b32.xlu0 %v294, 1
        %v461 = vpop.permute.xlu0 %460
        %462 = vrot.lane.b32.xlu0 %v295, 1
        %v463 = vpop.permute.xlu0 %462
        %464 = vrot.lane.b32.xlu0 %v296, 1
        %v465 = vpop.permute.xlu0 %464
        %466 = vrot.lane.b32.xlu0 %v297, 1
        %v467 = vpop.permute.xlu0 %466
        %vm472 = vcmask 7168
        %v473 = vsel %vm472, 0.0, %v461
        %v474 = vsel %vm472, 0.0, %v463
        %v475 = vsel %vm472, 0.0, %v465
        %v476 = vsel %vm472, 0.0, %v467
        %vm477 = vcmask 531456
        %v478 = vsel %vm477, %v473, 0.0
        %v479 = vsel %vm477, %v474, 0.0
        %v480 = vsel %vm477, %v475, 0.0
        %v481 = vsel %vm477, %v476, 0.0
        %v482 = vadd.s32 %v298, 4294967295
        %vm483 = vcmp.ge.s32.totalorder %v482, 0
        %vm484 = vcmp.le.s32.totalorder %v482, 7
        %vm485 = vmand %vm483, %vm484
        %v486 = vsel %vm485, 1, 0
        %v487 = vlaneseq
        %v488 = vshrl.u32 %v487, 7
        %v489 = vsub.s32 0, %v488
        %v490 = vrot.slane %v486, %v489
        %vm491 = vcmp.eq.s32.totalorder %v490, 1
        %v492 = vsel %vm491, %v478, 0.0
        %v493 = vsel %vm491, %v479, 0.0
        %v494 = vsel %vm491, %v480, 0.0
        %v495 = vsel %vm491, %v481, 0.0
        %v496 = vadd.f32 %v492, 0.0
        %v497 = vadd.f32 %v493, 0.0
        %v498 = vadd.f32 %v494, 0.0
        %v499 = vadd.f32 %v495, 0.0
        %504 = vrot.lane.b32.xlu0 %v478, 127
        %v505 = vpop.permute.xlu0 %504
        %506 = vrot.lane.b32.xlu0 %v479, 127
        %v507 = vpop.permute.xlu0 %506
        %508 = vrot.lane.b32.xlu0 %v480, 127
        %v509 = vpop.permute.xlu0 %508
        %510 = vrot.lane.b32.xlu0 %v481, 127
        %v511 = vpop.permute.xlu0 %510
        %v516 = vadd.f32 %v496, %v505
        %v517 = vadd.f32 %v497, %v507
        %v518 = vadd.f32 %v498, %v509
        %v519 = vadd.f32 %v499, %v511
        %v520 = vadd.s32 %v298, 1
        %vm521 = vcmp.ge.s32.totalorder %v520, 0
        %vm522 = vcmp.le.s32.totalorder %v520, 7
        %vm523 = vmand %vm521, %vm522
        %v524 = vsel %vm523, 1, 0
        %v525 = vlaneseq
        %v526 = vshrl.u32 %v525, 7
        %v527 = vsub.s32 0, %v526
        %v528 = vrot.slane %v524, %v527
        %vm529 = vcmp.eq.s32.totalorder %v528, 1
        %530 = vrot.lane.b32.xlu0 %v478, 126
        %v531 = vpop.permute.xlu0 %530
        %532 = vrot.lane.b32.xlu0 %v479, 126
        %v533 = vpop.permute.xlu0 %532
        %534 = vrot.lane.b32.xlu0 %v480, 126
        %v535 = vpop.permute.xlu0 %534
        %536 = vrot.lane.b32.xlu0 %v481, 126
        %v537 = vpop.permute.xlu0 %536
        %v542 = vsel %vm529, %v531, 0.0
        %v543 = vsel %vm529, %v533, 0.0
        %v544 = vsel %vm529, %v535, 0.0
        %v545 = vsel %vm529, %v537, 0.0
        %v546 = vadd.f32 %v516, %v542
        %v547 = vadd.f32 %v517, %v543
        %v548 = vadd.f32 %v518, %v544
        %v549 = vadd.f32 %v519, %v545
        %554 = vrot.lane.b32.xlu0 %v546, 8
        %v555 = vpop.permute.xlu0 %554
        %556 = vrot.lane.b32.xlu0 %v547, 8
        %v557 = vpop.permute.xlu0 %556
        %558 = vrot.lane.b32.xlu0 %v548, 8
        %v559 = vpop.permute.xlu0 %558
        %560 = vrot.lane.b32.xlu0 %v549, 8
        %v561 = vpop.permute.xlu0 %560
        %vm566 = vcmask 64512
        %v567 = vsel %vm566, 0.0, %v555
        %v568 = vsel %vm566, 0.0, %v557
        %v569 = vsel %vm566, 0.0, %v559
        %v570 = vsel %vm566, 0.0, %v561
        %vm571 = vcmask 588800
        %v572 = vsel %vm571, %v567, 0.0
        %v573 = vsel %vm571, %v568, 0.0
        %v574 = vsel %vm571, %v569, 0.0
        %v575 = vsel %vm571, %v570, 0.0
        %v576 = vadd.s32 %v299, 4294967295
        %vm577 = vcmp.ge.s32.totalorder %v576, 0
        %vm578 = vcmp.le.s32.totalorder %v576, 7
        %vm579 = vmand %vm577, %vm578
        %v580 = vsel %vm579, 1, 0
        %v581 = vlaneseq
        %v582 = vshrl.u32 %v581, 7
        %v583 = vsub.s32 0, %v582
        %v584 = vrot.slane %v580, %v583
        %vm585 = vcmp.eq.s32.totalorder %v584, 1
        %v586 = vsel %vm585, %v572, 0.0
        %v587 = vsel %vm585, %v573, 0.0
        %v588 = vsel %vm585, %v574, 0.0
        %v589 = vsel %vm585, %v575, 0.0
        %v590 = vadd.f32 %v586, 0.0
        %v591 = vadd.f32 %v587, 0.0
        %v592 = vadd.f32 %v588, 0.0
        %v593 = vadd.f32 %v589, 0.0
        %598 = vrot.lane.b32.xlu0 %v572, 120
        %v599 = vpop.permute.xlu0 %598
        %600 = vrot.lane.b32.xlu0 %v573, 120
        %v601 = vpop.permute.xlu0 %600
        %602 = vrot.lane.b32.xlu0 %v574, 120
        %v603 = vpop.permute.xlu0 %602
        %604 = vrot.lane.b32.xlu0 %v575, 120
        %v605 = vpop.permute.xlu0 %604
        %v610 = vadd.f32 %v590, %v599
        %v611 = vadd.f32 %v591, %v601
        %v612 = vadd.f32 %v592, %v603
        %v613 = vadd.f32 %v593, %v605
        %v614 = vadd.s32 %v299, 1
        %vm615 = vcmp.ge.s32.totalorder %v614, 0
        %vm616 = vcmp.le.s32.totalorder %v614, 7
        %vm617 = vmand %vm615, %vm616
        %v618 = vsel %vm617, 1, 0
        %v619 = vlaneseq
        %v620 = vshrl.u32 %v619, 7
        %v621 = vsub.s32 0, %v620
        %v622 = vrot.slane %v618, %v621
        %vm623 = vcmp.eq.s32.totalorder %v622, 1
        %624 = vrot.lane.b32.xlu0 %v572, 112
        %v625 = vpop.permute.xlu0 %624
        %626 = vrot.lane.b32.xlu0 %v573, 112
        %v627 = vpop.permute.xlu0 %626
        %628 = vrot.lane.b32.xlu0 %v574, 112
        %v629 = vpop.permute.xlu0 %628
        %630 = vrot.lane.b32.xlu0 %v575, 112
        %v631 = vpop.permute.xlu0 %630
        %v636 = vsel %vm623, %v625, 0.0
        %v637 = vsel %vm623, %v627, 0.0
        %v638 = vsel %vm623, %v629, 0.0
        %v639 = vsel %vm623, %v631, 0.0
        %v640 = vadd.f32 %v610, %v636
        %v641 = vadd.f32 %v611, %v637
        %v642 = vadd.f32 %v612, %v638
        %v643 = vadd.f32 %v613, %v639
        %v648 = vrot.slane %v640, 7
        %v649 = vrot.slane %v641, 7
        %v650 = vrot.slane %v642, 7
        %v651 = vrot.slane %v643, 7
        %vm656 = vcmask 1040384
        %v657 = vsel %vm656, 0.0, %v648
        %v658 = vsel %vm656, 0.0, %v649
        %v659 = vsel %vm656, 0.0, %v650
        %v660 = vsel %vm656, 0.0, %v651
        %v661 = vsel %vm656, %v648, 0.0
        %v662 = vsel %vm656, %v649, 0.0
        %v663 = vsel %vm656, %v650, 0.0
        %v664 = vsel %vm656, %v651, 0.0
        %v665 = vadd.f32 %v657, 0.0
        %v666 = vadd.f32 %v658, 0.0
        %v667 = vadd.f32 %v659, 0.0
        %v668 = vadd.f32 %v660, 0.0
        %vm677 = vcmask 1046528
        %v678 = vrot.slane %v657, 1
        %v679 = vrot.slane %v661, 1
        %v680 = vsel %vm677, %v678, %v679
        %v681 = vrot.slane %v658, 1
        %v682 = vrot.slane %v662, 1
        %v683 = vsel %vm677, %v681, %v682
        %v684 = vrot.slane %v659, 1
        %v685 = vrot.slane %v663, 1
        %v686 = vsel %vm677, %v684, %v685
        %v687 = vrot.slane %v660, 1
        %v688 = vrot.slane %v664, 1
        %v689 = vsel %vm677, %v687, %v688
        %v694 = vadd.f32 %v665, %v680
        %v695 = vadd.f32 %v666, %v683
        %v696 = vadd.f32 %v667, %v686
        %v697 = vadd.f32 %v668, %v689
        %vm698 = vcmask 1045504
        %v699 = vrot.slane %v657, 2
        %v700 = vrot.slane %v661, 2
        %v701 = vsel %vm698, %v699, %v700
        %v702 = vrot.slane %v658, 2
        %v703 = vrot.slane %v662, 2
        %v704 = vsel %vm698, %v702, %v703
        %v705 = vrot.slane %v659, 2
        %v706 = vrot.slane %v663, 2
        %v707 = vsel %vm698, %v705, %v706
        %v708 = vrot.slane %v660, 2
        %v709 = vrot.slane %v664, 2
        %v710 = vsel %vm698, %v708, %v709
        %v715 = vadd.f32 %v694, %v701
        %v716 = vadd.f32 %v695, %v704
        %v717 = vadd.f32 %v696, %v707
        %v718 = vadd.f32 %v697, %v710
        %v719 = vmul.f32 %v715, 0.037037037
        %v720 = vmul.f32 %v716, 0.037037037
        %v721 = vmul.f32 %v717, 0.037037037
        %v722 = vmul.f32 %v718, 0.037037037
        %vm723 = vcmp.ge.f32.partialorder %v719, 1e-07
        %vm724 = vcmp.ge.f32.partialorder %v720, 1e-07
        %vm725 = vcmp.ge.f32.partialorder %v721, 1e-07
        %vm726 = vcmp.ge.f32.partialorder %v722, 1e-07
        %vm727 = vcmp.le.f32.partialorder %v719, 0.9999999
        %vm728 = vcmp.le.f32.partialorder %v720, 0.9999999
        %vm729 = vcmp.le.f32.partialorder %v721, 0.9999999
        %vm730 = vcmp.le.f32.partialorder %v722, 0.9999999
        %vm731 = vmand %vm723, %vm727
        %vm732 = vmand %vm724, %vm728
        %vm733 = vmand %vm725, %vm729
        %vm734 = vmand %vm726, %vm730
        %v735 = vsel %vm731, 1, 0
        %v736 = vsel %vm732, 1, 0
        %v737 = vsel %vm733, 1, 0
        %v738 = vsel %vm734, 1, 0
        %v739 = vcvt.s32.f32 %v735
        %v740 = vcvt.s32.f32 %v736
        %v741 = vcvt.s32.f32 %v737
        %v742 = vcvt.s32.f32 %v738
        %v743 = vsel %vm304, %v739, -inf
        %v744 = vsel %vm304, %v740, -inf
        %v745 = vsel %vm304, %v741, -inf
        %v746 = vsel %vm304, %v742, -inf
        %v747 = vmax.f32 %v743, %v744
        %v748 = vmax.f32 %v745, %v746
        %v749 = vmax.f32 %v747, %v748
        %v750 = vmul.f32 %v749, 2.0
        %v751 = vmax.f32 %v290, 1e-07
        %v752 = vmax.f32 %v291, 1e-07
        %v753 = vmax.f32 %v292, 1e-07
        %v754 = vmax.f32 %v293, 1e-07
        %v755 = vmin.f32 %v751, 1.0
        %v756 = vmin.f32 %v752, 1.0
        %v757 = vmin.f32 %v753, 1.0
        %v758 = vmin.f32 %v754, 1.0
        %v759 = vsub.f32 0.0, %v294
        %v760 = vsub.f32 0.0, %v295
        %v761 = vsub.f32 0.0, %v296
        %v762 = vsub.f32 0.0, %v297
        %v763 = vlog2.pop %v755
        %v764 = vmul.f32 %v763, 0.6931472
        %v765 = vlog2.pop %v756
        %v766 = vmul.f32 %v765, 0.6931472
        %v767 = vlog2.pop %v757
        %v768 = vmul.f32 %v767, 0.6931472
        %v769 = vlog2.pop %v758
        %v770 = vmul.f32 %v769, 0.6931472
        %v771 = vmul.f32 %v759, %v764
        %v772 = vmul.f32 %v760, %v766
        %v773 = vmul.f32 %v761, %v768
        %v774 = vmul.f32 %v762, %v770
        %v775 = vsel %vm304, %v771, 0.0
        %v776 = vsel %vm304, %v772, 0.0
        %v777 = vadd.f32 %v775, %v776
        %v778 = vsel %vm304, %v773, 0.0
        %v779 = vadd.f32 %v777, %v778
        %v780 = vsel %vm304, %v774, 0.0
        %v781 = vadd.f32 %v779, %v780
        %v782 = vadd.f32 %v750, 1.0
        %v783 = vmul.f32 %v781, %v782
        %v784 = vsel %vm304, %v783, 0.0
        %785 = vadd.xlane.f32.xlu0 %v784
        %v786 = vpop.xlane.xlu0 %785
        %v787 = vrot.slane %v786, 4
        %v788 = vadd.f32 %v786, %v787
        %v789 = vrot.slane %v788, 2
        %v790 = vadd.f32 %v788, %v789
        %v791 = vrot.slane %v790, 1
        %v792 = vadd.f32 %v790, %v791
        %s793 = vtos %v792
        %v794 = vstv %s793
        %795 = vst.msk [vmem:[%s289] sm:$0x1] %vm454, %v794
        %p796 = scmp.lt.s32.totalorder %s23, 1
        %s797 = scalar_select %p796, %s23, 1
        %s798 = scalar_lea.vmem %s4, %s797
        %p799 = scmp.lt.s32.totalorder %s23, 1
        %s800 = scalar_select %p799, %s23, 1
        %s801 = scalar_lea.vmem %s5, %s800
        // Predicated region
        $region45: #{tpu_custom_call.1} parent=35 // pred_check
          %p802 = pneg %p135
        $region46: #{tpu_custom_call.1} parent=35 // pred_check_branch
          %804 = sbr.rel (%p802) target = $region48
        $region47: #{tpu_custom_call.1} parent=35 // pred_region
          _
        $region48: #{tpu_custom_call.1} parent=35 // pred_fallthru
          _
        // Predicated region
        $region49: #{tpu_custom_call.1} parent=35 // pred_check
          %p805 = pneg %p161
        $region50: #{tpu_custom_call.1} parent=35 // pred_check_branch
          %807 = sbr.rel (%p805) target = $region52
        $region51: #{tpu_custom_call.1} parent=35 // pred_region
          _
        $region52: #{tpu_custom_call.1} parent=35 // pred_fallthru
          _
      $region36: #{tpu_custom_call.1} parent=5 // pred_fallthru
        _
      %p808 = scmp.le.s32.totalorder 2, %s18
      // Predicated region
      $region53: #{tpu_custom_call.1} parent=5 // pred_check
        %p809 = pneg %p808
      $region54: #{tpu_custom_call.1} parent=5 // pred_check_branch
        %811 = sbr.rel (%p809) target = $region56
      $region55: #{tpu_custom_call.1} parent=5 // pred_region
        %s812 = ssub.s32 %s18, 2
        // Predicated region
        $region57: #{tpu_custom_call.1} parent=55 // pred_check
          %p813 = pneg %p141
        $region58: #{tpu_custom_call.1} parent=55 // pred_check_branch
          %815 = sbr.rel (%p813) target = $region60
        $region59: #{tpu_custom_call.1} parent=55 // pred_region
          %p816 = scmp.lt.s32.totalorder %s24, 1
          %s817 = scalar_select %p816, %s24, 1
          %s818 = scalar_lea.vmem %s4, %s817
        $region60: #{tpu_custom_call.1} parent=55 // pred_fallthru
          _
        // Predicated region
        $region61: #{tpu_custom_call.1} parent=55 // pred_check
          %p819 = pneg %p167
        $region62: #{tpu_custom_call.1} parent=55 // pred_check_branch
          %821 = sbr.rel (%p819) target = $region64
        $region63: #{tpu_custom_call.1} parent=55 // pred_region
          %p822 = scmp.lt.s32.totalorder %s24, 1
          %s823 = scalar_select %p822, %s24, 1
          %s824 = scalar_lea.vmem %s5, %s823
        $region64: #{tpu_custom_call.1} parent=55 // pred_fallthru
          _
      $region56: #{tpu_custom_call.1} parent=5 // pred_fallthru
        _
    $region6: #{tpu_custom_call.1} parent=1 // loop_footer
      %s22 = sadd.s32 1, %s18
    $region7: #{tpu_custom_call.1} parent=1 // loop_footer_branch
      %17 = sbr.rel target = $region3
    $region8: #{tpu_custom_call.1} parent=1 // loop_exit
      _
    %825 = vsyncpa [#allocation3], 1
    %s826 = scalar_lea.sflag [#allocation3], 1
    %827 = vsyncpa %s826, 1
    %828 = vsyncpa [#allocation5], 1
    %s829 = scalar_lea.sflag [#allocation5], 1
    %830 = vsyncpa %s829, 1

</llo_original>
